<compile_context>
chip_gen: v7x
topology: tpu7x:2x2x1
jax: 0.10.0
libtpu: 0.0.40
codegen_flags: <defaults>
</compile_context>

<pallas_src>
import functools
import math

import jax
import jax.numpy as jnp
from jax.experimental import pallas as pl
from jax.experimental.pallas import tpu as pltpu


def _round_up(x, m):
    return -(-x // m) * m


_SUBLANE = {1: 32, 2: 16, 4: 8}  # rows per vreg-sublane group by itemsize


def _pick_tiles(n_rows, vocab, itemsize, *, block_budget_bytes=4 * 1024 * 1024):
    """(tile_n, chunk): DMA block rows (byte-sized) and inner compute-chunk rows."""
    sub = _SUBLANE.get(itemsize, 8)
    per_row = max(1, vocab * itemsize)
    tn = max(sub, (block_budget_bytes // per_row) // sub * sub)
    # v7x has 2 TensorCores: keep >= 2 grid steps when the row count allows it.
    if tn >= n_rows and n_rows >= 4 * sub:
        tn = _round_up(pl.cdiv(n_rows, 2), sub)
    tn = min(tn, _round_up(n_rows, sub))
    # Inner compute chunk: keep live intermediates to ~32 vregs (<= 32K elements).
    ch = ((32 * 1024) // max(vocab, 1)) // sub * sub
    ch = max(sub, min(ch, tn))
    tn = max(ch, (tn // ch) * ch)          # tile is a whole number of chunks
    return int(tn), int(ch)


def _vmem_limit_bytes(tile_n, vocab, itemsize):
    """Double-buffered logp block + lane-padded narrow blocks + headroom, capped for v7x."""
    logp_buf = tile_n * vocab * itemsize
    narrow_buf = tile_n * 128 * 4          # (tile_n, 1) blocks pad to 128 lanes in VMEM
    est = 2 * (logp_buf + 2 * narrow_buf) + 2 * vocab * 4 + (4 << 20)
    return int(min(48 << 20, max(16 << 20, est)))


def _label_smoothing_kernel(logp_ref, tgt_ref, oh_ref, out_ref, *,
                            confidence, chunk, n_chunks):
    oh = oh_ref[...]                                          # (1, V) resident template
    conf = jnp.asarray(confidence, dtype=oh.dtype)
    vocab = oh.shape[-1]

    def body(c, carry):
        r0 = pl.multiple_of(c * chunk, chunk)
        logp = logp_ref[pl.ds(r0, chunk), :]                  # (chunk, V) f32 or bf16
        tgt = tgt_ref[pl.ds(r0, chunk), :]                    # (chunk, 1) i32
        col = jax.lax.broadcasted_iota(jnp.int32, (chunk, vocab), 1)
        w = jnp.where(col == tgt, conf, oh)                   # true_dist tile (scatter)
        prod = (w * logp).astype(jnp.float32)                 # bf16 VPU math; f32 accumulate
        out_ref[pl.ds(r0, chunk), :] = jnp.sum(prod, axis=-1, keepdims=True)
        return carry

    jax.lax.fori_loop(0, n_chunks, body, 0, unroll=n_chunks <= 8)


def label_smoothing_loss(model_prob, target, one_hot, confidence, *,
                         block_budget_bytes=4 * 1024 * 1024):
    """model_prob: (..., V) log-probs (f32 or bf16); target: (...) ints; returns (...) f32."""
    lead = model_prob.shape[:-1]
    V = model_prob.shape[-1]
    logp = model_prob.reshape(-1, V)
    if logp.dtype not in (jnp.float32, jnp.bfloat16):
        logp = logp.astype(jnp.float32)
    compute_dtype = logp.dtype
    tgt_flat = target.reshape(-1).astype(jnp.int32)
    tgt = tgt_flat.reshape(-1, 1)
    N = logp.shape[0]

    itemsize = jnp.dtype(compute_dtype).itemsize
    tile_n, chunk = _pick_tiles(N, V, itemsize, block_budget_bytes=block_budget_bytes)
    n_blocks = pl.cdiv(N, tile_n)
    n_chunks = tile_n // chunk

    oh_row = one_hot.reshape(1, V).astype(compute_dtype)      # template in compute dtype
    conf = float(confidence)

    # Kernel computes S[row] = sum_v true_dist[row, v] * logp[row, v].
    s = pl.pallas_call(
        functools.partial(_label_smoothing_kernel,
                          confidence=conf, chunk=chunk, n_chunks=n_chunks),
        out_shape=jax.ShapeDtypeStruct((N, 1), jnp.float32),
        grid_spec=pltpu.PrefetchScalarGridSpec(
            num_scalar_prefetch=0,
            grid=(n_blocks,),
            in_specs=[
                pl.BlockSpec((tile_n, V), lambda i: (i, 0)),  # streamed log-prob tile
                pl.BlockSpec((tile_n, 1), lambda i: (i, 0)),  # target tile
                pl.BlockSpec((1, V), lambda i: (0, 0)),       # one_hot template (resident)
            ],
            out_specs=pl.BlockSpec((tile_n, 1), lambda i: (i, 0)),
        ),
        compiler_params=pltpu.CompilerParams(
            dimension_semantics=("parallel",),
            vmem_limit_bytes=_vmem_limit_bytes(tile_n, V, itemsize)),
    )(logp, tgt, oh_row)

    # Entropy / target-constant term hoisted out of the per-element kernel path:
    # K[row] = sum_v xlogy(one_hot) + conf*log(conf) - xlogy(one_hot[target]); loss = K - S.
    oh_f32 = one_hot.reshape(V).astype(jnp.float32)
    xlogy_oh = jnp.where(oh_f32 > 0.0,
                         oh_f32 * jnp.log(jnp.where(oh_f32 > 0.0, oh_f32, 1.0)), 0.0)
    conf_log_conf = conf * math.log(conf) if conf > 0.0 else 0.0
    k_rows = jnp.sum(xlogy_oh) + jnp.float32(conf_log_conf) - jnp.take(xlogy_oh, tgt_flat)

    return (k_rows - s[:, 0]).reshape(lead)


def make_one_hot(smoothing, tgt_vocab_size, ignore_indices):
    smoothing_value = smoothing / float(tgt_vocab_size - 1 - len(ignore_indices))
    oh = jnp.full((tgt_vocab_size,), smoothing_value, dtype=jnp.float32)
    for idx in ignore_indices:
        oh = oh.at[idx].set(0.0)
    return oh


def _reference(model_prob, target, one_hot, confidence):
    V = model_prob.shape[-1]
    td = jnp.broadcast_to(one_hot, model_prob.shape).astype(jnp.float32)
    onehot_tgt = jax.nn.one_hot(target, V, dtype=bool)
    td = jnp.where(onehot_tgt, jnp.float32(confidence), td)
    xlogy = jnp.where(td > 0, td * jnp.log(jnp.where(td > 0, td, 1.0)), 0.0)
    return jnp.sum(xlogy - td * model_prob.astype(jnp.float32), axis=-1)


if __name__ == "__main__":
    # Module "parameters" (deterministic, in-script)
    smoothing = 0.1
    tgt_vocab_size = 128
    ignore_indices = [0]
    confidence = 1.0 - smoothing
    one_hot = make_one_hot(smoothing, tgt_vocab_size, ignore_indices)

    key = jax.random.PRNGKey(0)
    k1, k2, k3, k4 = jax.random.split(key, 4)

    # Inputs: batch=2, seq=8, vocab=128 -> model_prob (2, 8, 128) log-probs
    logits = jax.random.normal(k1, (2, 8, tgt_vocab_size), dtype=jnp.float32)
    model_prob = jax.nn.log_softmax(logits, axis=-1)
    target = jax.random.randint(k2, (2, 8), 0, tgt_vocab_size, dtype=jnp.int32)

    out = label_smoothing_loss(model_prob, target, one_hot, confidence)
    out = jax.block_until_ready(out)
    ref = _reference(model_prob, target, one_hot, confidence)
    assert out.shape == target.shape
    assert jnp.allclose(out, ref, atol=1e-5, rtol=1e-5)

    # bf16 input path (halves HBM read traffic; bf16 VPU math, f32 accumulation).
    out_bf16 = label_smoothing_loss(model_prob.astype(jnp.bfloat16), target,
                                    one_hot, confidence)
    out_bf16 = jax.block_until_ready(out_bf16)
    assert jnp.allclose(out_bf16, ref, atol=5e-2, rtol=5e-2)

    # Multi-block grid with a ragged tail block (N=50 -> tile 32, grid 2, no host pad copy).
    logits2 = jax.random.normal(k3, (5, 10, tgt_vocab_size), dtype=jnp.float32)
    model_prob2 = jax.nn.log_softmax(logits2, axis=-1)
    target2 = jax.random.randint(k4, (5, 10), 0, tgt_vocab_size, dtype=jnp.int32)
    out2 = label_smoothing_loss(model_prob2, target2, one_hot, confidence)
    out2 = jax.block_until_ready(out2)
    ref2 = _reference(model_prob2, target2, one_hot, confidence)
    assert out2.shape == target2.shape
    assert jnp.allclose(out2, ref2, atol=1e-5, rtol=1e-5)

    print("KERNEL_OK")
</pallas_src>

<mosaic_0001>
module attributes {stable_mosaic.version = 11 : i64} {
  func.func @_label_smoothing_kernel(%arg0: i32, %arg1: memref<16x128xf32, #tpu.memory_space<vmem>>, %arg2: memref<16x1xi32, #tpu.memory_space<vmem>>, %arg3: memref<1x128xf32, #tpu.memory_space<vmem>>, %arg4: memref<16x1xf32, #tpu.memory_space<vmem>>) attributes {dimension_semantics = [#tpu.dimension_semantics<parallel>], iteration_bounds = array<i64: 1>, scalar_prefetch = 0 : i64, scratch_operands = 0 : i64, tpu.core_type = #tpu.core_type<tc>, window_params = [{transform_indices = @transform_0, window_bounds = array<i64: 16, 128>}, {transform_indices = @transform_1, window_bounds = array<i64: 16, 1>}, {pipeline_mode = #tpu.pipeline_mode<synchronous>, transform_indices = @transform_2, window_bounds = array<i64: 1, 128>}, {transform_indices = @transform_3, window_bounds = array<i64: 16, 1>}]} {
    %c0 = arith.constant 0 : index
    %c0_0 = arith.constant 0 : index
    %0 = vector.load %arg3[%c0, %c0_0] : memref<1x128xf32, #tpu.memory_space<vmem>>, vector<1x128xf32>
    %cst = arith.constant 0.899999976 : f32
    %c0_i32 = arith.constant 0 : i32
    %c16_i32 = arith.constant 16 : i32
    %1 = arith.muli %c0_i32, %c16_i32 : i32
    %2 = tpu.assume_multiple %1, 16 : i32
    %3 = arith.index_cast %2 : i32 to index
    %c0_1 = arith.constant 0 : index
    %4 = vector.load %arg1[%3, %c0_1] : memref<16x128xf32, #tpu.memory_space<vmem>>, vector<16x128xf32>
    %5 = arith.index_cast %2 : i32 to index
    %c0_2 = arith.constant 0 : index
    %6 = vector.load %arg2[%5, %c0_2] : memref<16x1xi32, #tpu.memory_space<vmem>>, vector<16x1xi32>
    %7 = tpu.iota {dimensions = array<i32: 1>} : vector<16x128xi32>
    %8 = vector.broadcast %6 : vector<16x1xi32> to vector<16x128xi32>
    %9 = arith.cmpi eq, %7, %8 : vector<16x128xi32>
    %10 = vector.broadcast %cst : f32 to vector<16x128xf32>
    %11 = vector.shape_cast %0 : vector<1x128xf32> to vector<1x128xf32>
    %12 = vector.broadcast %11 : vector<1x128xf32> to vector<16x128xf32>
    %13 = arith.select %9, %10, %12 : vector<16x128xi1>, vector<16x128xf32>
    %14 = arith.mulf %13, %4 : vector<16x128xf32>
    %cst_3 = arith.constant dense<0.000000e+00> : vector<16xf32>
    %15 = vector.multi_reduction <add>, %14, %cst_3 [1] : vector<16x128xf32> to vector<16xf32>
    %16 = vector.shape_cast %15 : vector<16xf32> to vector<16x1xf32>
    %17 = arith.index_cast %2 : i32 to index
    %c0_4 = arith.constant 0 : index
    %18 = vector.load %arg4[%17, %c0_4] : memref<16x1xf32, #tpu.memory_space<vmem>>, vector<16x1xf32>
    tpu.vector_store %arg4[%17, %c0_4], %16 {strides = array<i32>} : memref<16x1xf32, #tpu.memory_space<vmem>>, vector<16x1xf32>,
    %c1_i32 = arith.constant 1 : i32
    return
  }
  func.func @transform_0(%arg0: i32) -> (i32, i32) {
    %c0_i32 = arith.constant 0 : i32
    %c0_i32_0 = arith.constant 0 : i32
    return %arg0, %c0_i32 : i32, i32
  }
  func.func @transform_1(%arg0: i32) -> (i32, i32) {
    %c0_i32 = arith.constant 0 : i32
    %c0_i32_0 = arith.constant 0 : i32
    return %arg0, %c0_i32 : i32, i32
  }
  func.func @transform_2(%arg0: i32) -> (i32, i32) {
    %c0_i32 = arith.constant 0 : i32
    %c0_i32_0 = arith.constant 0 : i32
    %c0_i32_1 = arith.constant 0 : i32
    return %c0_i32, %c0_i32_0 : i32, i32
  }
  func.func @transform_3(%arg0: i32) -> (i32, i32) {
    %c0_i32 = arith.constant 0 : i32
    %c0_i32_0 = arith.constant 0 : i32
    return %arg0, %c0_i32 : i32, i32
  }
}

</mosaic_0001>

<llo_original>
// kernel: tpu_custom_call.1
$region0: #{tpu_custom_call.1}
  #allocation0 [shape = 'u32[]', space=smem, size = 0x4, offset = 0x4, fixed_abs, tag = 'smem constant byte address 0x4 - core index']
  #allocation1 [shape = 'u32[144,128]{1,0:T(1,128)}', space=vmem, size = 0x12000, scoped, tag = 'internal scratch']
  %s0 = inlined_call_operand.vmem [shape: f32[16,128], index: 0, kind: input, shape index: {}]
  %s1 = inlined_call_operand.vmem [shape: s32[16,1], index: 1, kind: input, shape index: {}]
  %s2 = inlined_call_operand.vmem [shape: f32[1,128], index: 2, kind: input, shape index: {}]
  %s3 = inlined_call_operand.vmem [shape: f32[16,1], index: 3, kind: output, shape index: {}]
  %s4 = sld [smem:[#allocation0]]
  $region22: #{tpu_custom_call.1} parent=0
    _
  %s6 = ssub.s32 1, %s4
  %s7 = scalar_select 0, %s6, %s4
  // Predicated region
  $region2: #{tpu_custom_call.1} parent=0 // pred_check
    _
  $region3: #{tpu_custom_call.1} parent=0 // pred_check_branch
    %9 = sbr.rel (0) target = $region5
  $region4: #{tpu_custom_call.1} parent=0 // pred_region
    _
  $region5: #{tpu_custom_call.1} parent=0 // pred_fallthru
    _
  // Predicated region
  $region6: #{tpu_custom_call.1} parent=0 // pred_check
    _
  $region7: #{tpu_custom_call.1} parent=0 // pred_check_branch
    %11 = sbr.rel (0) target = $region9
  $region8: #{tpu_custom_call.1} parent=0 // pred_region
    _
  $region9: #{tpu_custom_call.1} parent=0 // pred_fallthru
    _
  // Predicated region
  $region10: #{tpu_custom_call.1} parent=0 // pred_check
    _
  $region11: #{tpu_custom_call.1} parent=0 // pred_check_branch
    %13 = sbr.rel (0) target = $region13
  $region12: #{tpu_custom_call.1} parent=0 // pred_region
    _
  $region13: #{tpu_custom_call.1} parent=0 // pred_fallthru
    _
  %v14 = vld [vmem:[%s2] sm:$0x1]
  %v15 = vld [vmem:[%s0] sm:$0xff]
  %v16 = vld [vmem:[%s0 + $0x8] sm:$0xff]
  %v17 = vld [vmem:[%s1] sm:$0xff]
  %v18 = vld [vmem:[%s1 + $0x8] sm:$0xff]
  %v19 = vlaneseq
  %v20 = vand.u32 %v19, 127
  %21 = vset.pattern.permute.xlu0 0
  %22 = vperm.xlu0 %21, %v17
  %v23 = vpop.permute.xlu0 %22
  %24 = vset.pattern.permute.xlu0 0
  %25 = vperm.xlu0 %24, %v18
  %v26 = vpop.permute.xlu0 %25
  %vm27 = vcmp.eq.s32.totalorder %v20, %v23
  %vm28 = vcmp.eq.s32.totalorder %v20, %v26
  %v30 = vlaneseq
  %v31 = vshrl.u32 %v30, 7
  %v32 = vsub.s32 0, %v31
  %v33 = vrot.slane %v14, %v32
  %v35 = vsel %vm27, 0.9, %v33
  %v36 = vsel %vm28, 0.9, %v33
  %v37 = vmul.f32 %v35, %v15
  %v38 = vmul.f32 %v36, %v16
  %39 = vadd.xlane.f32.xlu0 %v37
  %v40 = vpop.xlane.xlu0 %39
  %41 = vadd.xlane.f32.xlu0 %v38
  %v42 = vpop.xlane.xlu0 %41
  %vm43 = vcmask 7168
  %44 = vst.msk [vmem:[%s3] sm:$0xff] %vm43, %v40
  %45 = vst.msk [vmem:[%s3 + $0x8] sm:$0xff] %vm43, %v42
  // Predicated region
  $region14: #{tpu_custom_call.1} parent=0 // pred_check
    _
  $region15: #{tpu_custom_call.1} parent=0 // pred_check_branch
    %47 = sbr.rel (0) target = $region17
  $region16: #{tpu_custom_call.1} parent=0 // pred_region
    _
  $region17: #{tpu_custom_call.1} parent=0 // pred_fallthru
    _
  // Predicated region
  $region18: #{tpu_custom_call.1} parent=0 // pred_check
    _
  $region19: #{tpu_custom_call.1} parent=0 // pred_check_branch
    %49 = sbr.rel (0) target = $region21
  $region20: #{tpu_custom_call.1} parent=0 // pred_region
    _
  $region21: #{tpu_custom_call.1} parent=0 // pred_fallthru
    _

</llo_original>
